<compile_context>
chip_gen: v7x
topology: tpu7x:2x2x1
jax: 0.10.0
libtpu: 0.0.40
codegen_flags: <defaults>
</compile_context>

<pallas_src>
import functools
import math

import jax
import jax.numpy as jnp
from jax.experimental import pallas as pl
from jax.experimental.pallas import tpu as pltpu


# ---------------------------------------------------------------------------
# Generation-aware VMEM budget
# ---------------------------------------------------------------------------
_VMEM_LIMIT_CACHE = [None]


def _vmem_limit_bytes():
    if _VMEM_LIMIT_CACHE[0] is None:
        cap = None
        try:
            info = pltpu.get_tpu_info()
            cap = getattr(info, "vmem_capacity_bytes", None)
        except Exception:
            cap = None
        if not cap:
            cap = 64 * 1024 * 1024  # conservative (v7x per-TC VMEM)
        # ~25% headroom: 128 MiB parts (v5e/v6e) -> 96 MiB, v7x (64 MiB) -> 48 MiB.
        _VMEM_LIMIT_CACHE[0] = min(int(cap * 3 // 4), 96 * 1024 * 1024)
    return _VMEM_LIMIT_CACHE[0]


def _pick_tile(dim, pref, align):
    """Largest power-of-two-stepped tile (pref .. align) dividing dim, else full dim."""
    t = pref
    while t >= align:
        if dim % t == 0:
            return t
        t //= 2
    return dim


def _heads_per_block(num_heads, head_dim):
    """Smallest head-group so the attention block's last dim is 128-aligned,
    else all heads (block last dim == E, full-dim exception)."""
    for g in range(1, num_heads + 1):
        if num_heads % g == 0 and (g * head_dim) % 128 == 0:
            return g
    return num_heads


def _to_bf16(x):
    return x if x.dtype == jnp.bfloat16 else x.astype(jnp.bfloat16)


# ---------------------------------------------------------------------------
# Kernel 1: tiled linear (matmul + optional bias), bf16 MXU / f32 accumulate
# ---------------------------------------------------------------------------
def _matmul_kernel(*refs, has_bias):
    if has_bias:
        x_ref, w_ref, b_ref, o_ref, acc_ref = refs
    else:
        x_ref, w_ref, o_ref, acc_ref = refs
        b_ref = None
    kk = pl.program_id(2)

    @pl.when(kk == 0)
    def _():
        acc_ref[...] = jnp.zeros_like(acc_ref)

    acc_ref[...] += jnp.dot(_to_bf16(x_ref[...]), _to_bf16(w_ref[...]),
                            preferred_element_type=jnp.float32)

    @pl.when(kk == pl.num_programs(2) - 1)
    def _():
        out = acc_ref[...]
        if has_bias:
            out = out + b_ref[...].astype(jnp.float32)
        o_ref[...] = out.astype(o_ref.dtype)


def linear(x2d, w, b=None, *, out_dtype=None, tm=512, tn=512, tk=512):
    T, K = x2d.shape
    Dout = w.shape[1]
    out_dtype = x2d.dtype if out_dtype is None else out_dtype
    tm = _pick_tile(T, tm, 8)
    tn = _pick_tile(Dout, tn, 128)   # lane-dense output tiles (or full Dout)
    tk = _pick_tile(K, tk, 128)
    has_bias = b is not None

    in_specs = [pl.BlockSpec((tm, tk), lambda i, j, k: (i, k)),
                pl.BlockSpec((tk, tn), lambda i, j, k: (k, j))]
    args = [x2d, w]
    if has_bias:
        in_specs.append(pl.BlockSpec((1, tn), lambda i, j, k: (0, j)))
        args.append(b.reshape(1, Dout))

    return pl.pallas_call(
        functools.partial(_matmul_kernel, has_bias=has_bias),
        out_shape=jax.ShapeDtypeStruct((T, Dout), out_dtype),
        grid_spec=pltpu.PrefetchScalarGridSpec(
            num_scalar_prefetch=0,
            grid=(T // tm, Dout // tn, K // tk),
            in_specs=in_specs,
            out_specs=pl.BlockSpec((tm, tn), lambda i, j, k: (i, j)),
            scratch_shapes=[pltpu.VMEM((tm, tn), jnp.float32)]),
        compiler_params=pltpu.CompilerParams(
            dimension_semantics=("parallel", "parallel", "arbitrary"),
            vmem_limit_bytes=_vmem_limit_bytes()),
    )(*args)


# ---------------------------------------------------------------------------
# Kernel 2: fused K + V projection, sharing the loaded key_value tile
# ---------------------------------------------------------------------------
def _kv_proj_kernel(x_ref, wk_ref, wv_ref, ko_ref, vo_ref, acck_ref, accv_ref):
    kk = pl.program_id(2)

    @pl.when(kk == 0)
    def _():
        acck_ref[...] = jnp.zeros_like(acck_ref)
        accv_ref[...] = jnp.zeros_like(accv_ref)

    xb = _to_bf16(x_ref[...])                 # loaded once, used twice
    acck_ref[...] += jnp.dot(xb, _to_bf16(wk_ref[...]),
                             preferred_element_type=jnp.float32)
    accv_ref[...] += jnp.dot(xb, _to_bf16(wv_ref[...]),
                             preferred_element_type=jnp.float32)

    @pl.when(kk == pl.num_programs(2) - 1)
    def _():
        ko_ref[...] = acck_ref[...].astype(ko_ref.dtype)
        vo_ref[...] = accv_ref[...].astype(vo_ref.dtype)


def kv_linear(x2d, wk, wv, *, out_dtype=None, tm=512, tn=512, tk=512):
    T, K = x2d.shape
    Dout = wk.shape[1]
    out_dtype = x2d.dtype if out_dtype is None else out_dtype
    tm = _pick_tile(T, tm, 8)
    tn = _pick_tile(Dout, tn, 128)
    tk = _pick_tile(K, tk, 128)
    return pl.pallas_call(
        _kv_proj_kernel,
        out_shape=(jax.ShapeDtypeStruct((T, Dout), out_dtype),
                   jax.ShapeDtypeStruct((T, Dout), out_dtype)),
        grid_spec=pltpu.PrefetchScalarGridSpec(
            num_scalar_prefetch=0,
            grid=(T // tm, Dout // tn, K // tk),
            in_specs=[pl.BlockSpec((tm, tk), lambda i, j, k: (i, k)),
                      pl.BlockSpec((tk, tn), lambda i, j, k: (k, j)),
                      pl.BlockSpec((tk, tn), lambda i, j, k: (k, j))],
            out_specs=[pl.BlockSpec((tm, tn), lambda i, j, k: (i, j)),
                       pl.BlockSpec((tm, tn), lambda i, j, k: (i, j))],
            scratch_shapes=[pltpu.VMEM((tm, tn), jnp.float32),
                            pltpu.VMEM((tm, tn), jnp.float32)]),
        compiler_params=pltpu.CompilerParams(
            dimension_semantics=("parallel", "parallel", "arbitrary"),
            vmem_limit_bytes=_vmem_limit_bytes()),
    )(x2d, wk, wv)


# ---------------------------------------------------------------------------
# Kernel 3: flash-style attention core on (B, seq, E)-layout tensors.
# Head split/merge is done by the BlockSpecs (no wrapper transposes); each
# grid step handles `heads_per_block` heads whose channels are contiguous.
# q arrives pre-scaled by 1/sqrt(head_dim) (folded into wq).
# ---------------------------------------------------------------------------
def _flash_attn_kernel(q_ref, k_ref, v_ref, o_ref, m_sc, l_sc, acc_sc, *,
                       heads_per_block, head_dim):
    ki = pl.program_id(3)

    @pl.when(ki == 0)
    def _():
        m_sc[...] = jnp.full_like(m_sc, -jnp.inf)
        l_sc[...] = jnp.zeros_like(l_sc)
        acc_sc[...] = jnp.zeros_like(acc_sc)

    q = _to_bf16(q_ref[0])   # (tq,  G*D), already scaled by 1/sqrt(D)
    k = _to_bf16(k_ref[0])   # (tkv, G*D)
    v = _to_bf16(v_ref[0])   # (tkv, G*D)

    for g in range(heads_per_block):
        lo = g * head_dim
        hi = lo + head_dim
        # q_g @ k_g^T without an explicit transpose: contract last dims.
        s = jax.lax.dot_general(q[:, lo:hi], k[:, lo:hi],
                                (((1,), (1,)), ((), ())),
                                preferred_element_type=jnp.float32)  # (tq, tkv)
        m_prev = m_sc[g]                                             # (tq, 1)
        m_new = jnp.maximum(m_prev, jnp.max(s, axis=-1, keepdims=True))
        alpha = jnp.exp(m_prev - m_new)                              # f32
        p = jnp.exp(s - m_new)                                       # f32
        l_sc[g] = alpha * l_sc[g] + jnp.sum(p, axis=-1, keepdims=True)
        acc_sc[g] = alpha * acc_sc[g] + jnp.dot(
            p.astype(v.dtype), v[:, lo:hi], preferred_element_type=jnp.float32)
        m_sc[g] = m_new

    @pl.when(ki == pl.num_programs(3) - 1)
    def _():
        parts = []
        for g in range(heads_per_block):
            inv_l = pl.reciprocal(l_sc[g], approx=True)              # (tq, 1)
            parts.append(acc_sc[g] * inv_l)                          # (tq, D)
        out = parts[0] if heads_per_block == 1 else jnp.concatenate(parts, axis=-1)
        o_ref[0] = out.astype(o_ref.dtype)                           # lane-dense store


def flash_attention(q, k, v, num_heads, *, tq=512, tkv=512):
    """q: (B, N, E), k/v: (B, M, E)  ->  (B, N, E), all in head-concatenated layout."""
    B, N, E = q.shape
    M = k.shape[1]
    D = E // num_heads
    G = _heads_per_block(num_heads, D)
    GD = G * D
    n_hg = num_heads // G
    tq = _pick_tile(N, tq, 8)
    tkv = _pick_tile(M, tkv, 128)   # keep the score tile lane-dense (or full M)

    return pl.pallas_call(
        functools.partial(_flash_attn_kernel, heads_per_block=G, head_dim=D),
        out_shape=jax.ShapeDtypeStruct((B, N, E), q.dtype),
        grid_spec=pltpu.PrefetchScalarGridSpec(
            num_scalar_prefetch=0,
            grid=(B, n_hg, N // tq, M // tkv),
            in_specs=[
                pl.BlockSpec((1, tq, GD), lambda b, h, qi, ki: (b, qi, h)),
                pl.BlockSpec((1, tkv, GD), lambda b, h, qi, ki: (b, ki, h)),
                pl.BlockSpec((1, tkv, GD), lambda b, h, qi, ki: (b, ki, h)),
            ],
            out_specs=pl.BlockSpec((1, tq, GD), lambda b, h, qi, ki: (b, qi, h)),
            scratch_shapes=[pltpu.VMEM((G, tq, 1), jnp.float32),   # running max
                            pltpu.VMEM((G, tq, 1), jnp.float32),   # running denom
                            pltpu.VMEM((G, tq, D), jnp.float32)]), # running accum
        compiler_params=pltpu.CompilerParams(
            dimension_semantics=("parallel", "parallel", "parallel", "arbitrary"),
            vmem_limit_bytes=_vmem_limit_bytes()),
    )(q, k, v)


# ---------------------------------------------------------------------------
# Parameter preparation: fold sm_scale into wq, pre-cast weights to bf16 once
# ---------------------------------------------------------------------------
def prepare_params(params_f32, num_heads):
    embed_dim = params_f32["wq"].shape[1]
    head_dim = embed_dim // num_heads
    sm_scale = 1.0 / math.sqrt(head_dim)
    return {
        "wq": (params_f32["wq"] * sm_scale).astype(jnp.bfloat16),
        "wk": params_f32["wk"].astype(jnp.bfloat16),
        "wv": params_f32["wv"].astype(jnp.bfloat16),
        "wo": params_f32["wo"].astype(jnp.bfloat16),
        "bo": params_f32["bo"].astype(jnp.float32),
    }


# ---------------------------------------------------------------------------
# AttentionNestedTensor forward (dense MHA)
# ---------------------------------------------------------------------------
def attention_nested_tensor(params, query, key_value, num_heads):
    B, N, E = query.shape
    _, M, E_kv = key_value.shape
    kdim = params["wk"].shape[1]
    assert E % num_heads == 0, "dim should be divisible by num_heads"
    assert kdim == E, "standard dense processor requires kdim == embed_dim"

    # Projections (to_q / to_k / to_v have bias=False); bf16 intermediates.
    q = linear(query.reshape(B * N, E), params["wq"],
               out_dtype=jnp.bfloat16).reshape(B, N, E)
    k, v = kv_linear(key_value.reshape(B * M, E_kv), params["wk"], params["wv"],
                     out_dtype=jnp.bfloat16)
    k = k.reshape(B, M, E)
    v = v.reshape(B, M, E)

    # TODO(synk): qk_norm default config leaves norm_q/norm_k unset -> identity.
    # Head split/merge lives in the flash-attention BlockSpecs; no transposes.
    o = flash_attention(q, k, v, num_heads)            # (B, N, E) bf16

    # to_out[0] (Linear, bias=True); to_out[1] Dropout is eval-mode no-op.
    out = linear(o.reshape(B * N, E), params["wo"], params["bo"],
                 out_dtype=query.dtype)
    return out.reshape(B, N, E)


# ---------------------------------------------------------------------------
# Pure-JAX reference (f32) for a correctness sanity check
# ---------------------------------------------------------------------------
def reference_forward(params, query, key_value, num_heads):
    B, N, E = query.shape
    M = key_value.shape[1]
    D = E // num_heads
    q = query @ params["wq"]
    k = key_value @ params["wk"]
    v = key_value @ params["wv"]
    q = q.reshape(B, N, num_heads, D).transpose(0, 2, 1, 3)
    k = k.reshape(B, M, num_heads, D).transpose(0, 2, 1, 3)
    v = v.reshape(B, M, num_heads, D).transpose(0, 2, 1, 3)
    s = jnp.einsum("bhnd,bhmd->bhnm", q, k) / math.sqrt(D)
    p = jax.nn.softmax(s, axis=-1)
    o = jnp.einsum("bhnm,bhmd->bhnd", p, v)
    o = o.transpose(0, 2, 1, 3).reshape(B, N, E)
    return o @ params["wo"] + params["bo"]


def init_params(key, embed_dim, kdim=None):
    kdim = embed_dim if kdim is None else kdim
    ks = jax.random.split(key, 5)
    s = 0.02
    return {
        "wq": jax.random.normal(ks[0], (embed_dim, embed_dim), jnp.float32) * s,
        "wk": jax.random.normal(ks[1], (embed_dim, kdim), jnp.float32) * s,
        "wv": jax.random.normal(ks[2], (embed_dim, kdim), jnp.float32) * s,
        "wo": jax.random.normal(ks[3], (kdim, embed_dim), jnp.float32) * s,
        "bo": jax.random.normal(ks[4], (embed_dim,), jnp.float32) * s,
    }


if __name__ == "__main__":
    B, N, M = 2, 8, 8
    embed_dim = 32
    num_heads = 4

    root = jax.random.PRNGKey(0)
    k_p, k_q, k_kv = jax.random.split(root, 3)
    params_f32 = init_params(k_p, embed_dim)
    query = jax.random.normal(k_q, (B, N, embed_dim), jnp.float32)
    key_value = jax.random.normal(k_kv, (B, M, embed_dim), jnp.float32)

    params = prepare_params(params_f32, num_heads)
    out = attention_nested_tensor(params, query, key_value, num_heads)
    out = jax.block_until_ready(out)
    assert out.shape == (B, N, embed_dim)

    ref = reference_forward(params_f32, query, key_value, num_heads)
    max_err = float(jnp.max(jnp.abs(out - ref)))
    assert jnp.allclose(out, ref, rtol=5e-2, atol=1e-2), max_err

    print("KERNEL_OK")
</pallas_src>

<mosaic_0001>
module attributes {stable_mosaic.version = 11 : i64} {
  func.func @_matmul_kernel(%arg0: i32, %arg1: i32, %arg2: i32, %arg3: memref<16x32xf32, #tpu.memory_space<vmem>>, %arg4: memref<32x32xbf16, #tpu.memory_space<vmem>>, %arg5: memref<16x32xbf16, #tpu.memory_space<vmem>>, %arg6: memref<16x32xf32, #tpu.memory_space<vmem>>) attributes {dimension_semantics = [#tpu.dimension_semantics<parallel>, #tpu.dimension_semantics<parallel>, #tpu.dimension_semantics<arbitrary>], iteration_bounds = array<i64: 1, 1, 1>, scalar_prefetch = 0 : i64, scratch_operands = 1 : i64, tpu.core_type = #tpu.core_type<tc>, window_params = [{transform_indices = @transform_0, window_bounds = array<i64: 16, 32>}, {transform_indices = @transform_1, window_bounds = array<i64: 32, 32>}, {transform_indices = @transform_2, window_bounds = array<i64: 16, 32>}]} {
    %c0_i32 = arith.constant 0 : i32
    %0 = arith.cmpi eq, %arg2, %c0_i32 : i32
    %1 = arith.extui %0 : i1 to i32
    %c0_i32_0 = arith.constant 0 : i32
    %2 = arith.cmpi ne, %1, %c0_i32_0 : i32
    scf.if %2 {
      %cst_10 = arith.constant 0.000000e+00 : f32
      %13 = vector.broadcast %cst_10 : f32 to vector<16x32xf32>
      %c0_11 = arith.constant 0 : index
      %c0_12 = arith.constant 0 : index
      %14 = vector.load %arg6[%c0_11, %c0_12] : memref<16x32xf32, #tpu.memory_space<vmem>>, vector<16x32xf32>
      tpu.vector_store %arg6[%c0_11, %c0_12], %13 {strides = array<i32>} : memref<16x32xf32, #tpu.memory_space<vmem>>, vector<16x32xf32>,
    } else {
    }
    %c0 = arith.constant 0 : index
    %c0_1 = arith.constant 0 : index
    %3 = vector.load %arg6[%c0, %c0_1] : memref<16x32xf32, #tpu.memory_space<vmem>>, vector<16x32xf32>
    %c0_2 = arith.constant 0 : index
    %c0_3 = arith.constant 0 : index
    %4 = vector.load %arg3[%c0_2, %c0_3] : memref<16x32xf32, #tpu.memory_space<vmem>>, vector<16x32xf32>
    %5 = arith.truncf %4 : vector<16x32xf32> to vector<16x32xbf16>
    %c0_4 = arith.constant 0 : index
    %c0_5 = arith.constant 0 : index
    %6 = vector.load %arg4[%c0_4, %c0_5] : memref<32x32xbf16, #tpu.memory_space<vmem>>, vector<32x32xbf16>
    %cst = arith.constant dense<0.000000e+00> : vector<16x32xf32>
    %7 = tpu.matmul %5, %6, %cst {dimension_numbers = #tpu.dot_dimension_numbers<[1], [0], [0], [1], [0, 0, 1, 1], [], []>} : vector<16x32xbf16>, vector<32x32xbf16>, vector<16x32xf32> -> vector<16x32xf32>
    %8 = arith.addf %3, %7 : vector<16x32xf32>
    %c0_6 = arith.constant 0 : index
    %c0_7 = arith.constant 0 : index
    %9 = vector.load %arg6[%c0_6, %c0_7] : memref<16x32xf32, #tpu.memory_space<vmem>>, vector<16x32xf32>
    tpu.vector_store %arg6[%c0_6, %c0_7], %8 {strides = array<i32>} : memref<16x32xf32, #tpu.memory_space<vmem>>, vector<16x32xf32>,
    %c0_i32_8 = arith.constant 0 : i32
    %10 = arith.cmpi eq, %arg2, %c0_i32_8 : i32
    %11 = arith.extui %10 : i1 to i32
    %c0_i32_9 = arith.constant 0 : i32
    %12 = arith.cmpi ne, %11, %c0_i32_9 : i32
    scf.if %12 {
      %c0_10 = arith.constant 0 : index
      %c0_11 = arith.constant 0 : index
      %13 = vector.load %arg6[%c0_10, %c0_11] : memref<16x32xf32, #tpu.memory_space<vmem>>, vector<16x32xf32>
      %14 = arith.truncf %13 : vector<16x32xf32> to vector<16x32xbf16>
      %c0_12 = arith.constant 0 : index
      %c0_13 = arith.constant 0 : index
      %15 = vector.load %arg5[%c0_12, %c0_13] : memref<16x32xbf16, #tpu.memory_space<vmem>>, vector<16x32xbf16>
      tpu.vector_store %arg5[%c0_12, %c0_13], %14 {strides = array<i32>} : memref<16x32xbf16, #tpu.memory_space<vmem>>, vector<16x32xbf16>,
    } else {
    }
    return
  }
  func.func @transform_0(%arg0: i32, %arg1: i32, %arg2: i32) -> (i32, i32) {
    %c0_i32 = arith.constant 0 : i32
    return %arg0, %arg2 : i32, i32
  }
  func.func @transform_1(%arg0: i32, %arg1: i32, %arg2: i32) -> (i32, i32) {
    %c0_i32 = arith.constant 0 : i32
    return %arg2, %arg1 : i32, i32
  }
  func.func @transform_2(%arg0: i32, %arg1: i32, %arg2: i32) -> (i32, i32) {
    %c0_i32 = arith.constant 0 : i32
    return %arg0, %arg1 : i32, i32
  }
}

</mosaic_0001>

<llo_original>
// kernel: tpu_custom_call.1
$region0: #{tpu_custom_call.1}
  #allocation0 [shape = 'u32[]', space=smem, size = 0x4, offset = 0x4, fixed_abs, tag = 'smem constant byte address 0x4 - core index']
  #allocation1 [shape = 'u32[144,128]{1,0:T(1,128)}', space=vmem, size = 0x12000, scoped, tag = 'internal scratch']
  #allocation2 [shape = 'f32[16,32]{1,0:T(8,128)}', space=vmem, size = 0x2000, scoped, tag = 'scratch operand']
  %s0 = inlined_call_operand.hbm [shape: f32[16,32], index: 0, kind: input, shape index: {}]
  %s1 = inlined_call_operand.hbm [shape: bf16[32,32], index: 1, kind: input, shape index: {}]
  %s2 = inlined_call_operand.hbm [shape: bf16[16,32], index: 2, kind: output, shape index: {}]
  %s3 = sld [smem:[#allocation0]]
  $region34: #{tpu_custom_call.1} parent=0
    _
  %s5 = ssub.s32 1, %s3
  %s6 = scalar_select 0, %s5, %s3
  $region1: #{tpu_custom_call.1} parent=0
    #allocation3 [shape = 'u8[8192]{0}', space=vmem, size = 0x2000, scoped, tag = 'input window, operand 0, single buffered']
    #allocation4 [shape = 's32[1]{0}', space=sflag, size = 0x4, scoped, tag = 'scoped memory for tpu_custom_call.1']
    #allocation5 [shape = 's32[1]{0}', space=sflag, size = 0x4, scoped, tag = 'scoped memory for tpu_custom_call.1']
    #allocation6 [shape = 'u8[8192]{0}', space=vmem, size = 0x2000, scoped, tag = 'input window, operand 1, single buffered']
    #allocation7 [shape = 's32[1]{0}', space=sflag, size = 0x4, scoped, tag = 'scoped memory for tpu_custom_call.1']
    #allocation8 [shape = 'u8[4096]{0}', space=vmem, size = 0x1000, scoped, tag = 'output window, operand 0, single buffered']
    %7 = vsyncpa [#allocation4], 0
    %8 = vsyncpa [#allocation7], 0
    %9 = vsyncpa [#allocation5], 0
    // Predicated region
    $region2: #{tpu_custom_call.1} parent=1 // pred_check
      _
    $region3: #{tpu_custom_call.1} parent=1 // pred_check_branch
      %11 = sbr.rel (0) target = $region5
    $region4: #{tpu_custom_call.1} parent=1 // pred_region
      %s13 = ssub.s32 256, 256
      %14 = vsyncadd [#allocation4], %s13
      %s15 = sshll.u32 [#allocation3], 4
      %s16 = int_to_ptr.vmem [resolvable:$true] %s15
      %21 = dma.hbm_to_vmem [thread:$0]  %s0, 256, %s16, [#allocation4], 128, 128, 8
    $region5: #{tpu_custom_call.1} parent=1 // pred_fallthru
      _
    // Predicated region
    $region6: #{tpu_custom_call.1} parent=1 // pred_check
      _
    $region7: #{tpu_custom_call.1} parent=1 // pred_check_branch
      %23 = sbr.rel (0) target = $region9
    $region8: #{tpu_custom_call.1} parent=1 // pred_region
      %s25 = ssub.s32 256, 256
      %26 = vsyncadd [#allocation7], %s25
      %s27 = sshll.u32 [#allocation6], 4
      %s28 = int_to_ptr.vmem [resolvable:$true] %s27
      %33 = dma.hbm_to_vmem [thread:$0]  %s1, 256, %s28, [#allocation7], 64, 64, 4
    $region9: #{tpu_custom_call.1} parent=1 // pred_fallthru
      _
    // Predicated region
    $region10: #{tpu_custom_call.1} parent=1 // pred_check
      _
    $region11: #{tpu_custom_call.1} parent=1 // pred_check_branch
      %35 = sbr.rel (0) target = $region13
    $region12: #{tpu_custom_call.1} parent=1 // pred_region
      %36 = dma.done [#allocation4], 256
    $region13: #{tpu_custom_call.1} parent=1 // pred_fallthru
      _
    // Predicated region
    $region14: #{tpu_custom_call.1} parent=1 // pred_check
      _
    $region15: #{tpu_custom_call.1} parent=1 // pred_check_branch
      %38 = sbr.rel (0) target = $region17
    $region16: #{tpu_custom_call.1} parent=1 // pred_region
      %39 = dma.done [#allocation7], 256
    $region17: #{tpu_custom_call.1} parent=1 // pred_fallthru
      _
    %p41 = scmp.eq.s32.totalorder 0, 0
    // Predicated region
    $region18: #{tpu_custom_call.1} parent=1 // pred_check
      %p42 = pneg %p41
    $region19: #{tpu_custom_call.1} parent=1 // pred_check_branch
      %44 = sbr.rel (%p42) target = $region21
    $region20: #{tpu_custom_call.1} parent=1 // pred_region
      %vm45 = vcmask 261120
      %46 = vst.msk [vmem:[#allocation2] sm:$0xff] %vm45, 0.0
      %47 = vst.msk [vmem:[#allocation2 + $0x8] sm:$0xff] %vm45, 0.0
    $region21: #{tpu_custom_call.1} parent=1 // pred_fallthru
      _
    %v48 = vld [vmem:[#allocation2] sm:$0xff]
    %v49 = vld [vmem:[#allocation2 + $0x8] sm:$0xff]
    %v50 = vld [vmem:[#allocation3] sm:$0xff]
    %v51 = vld [vmem:[#allocation3 + $0x8] sm:$0xff]
    %v52 = vpack.c.bf16 %v51, %v50
    %v53 = vld [vmem:[#allocation6] sm:$0xf]
    %v54 = vld [vmem:[#allocation6 + $0x4] sm:$0xf]
    %v55 = vld [vmem:[#allocation6 + $0x8] sm:$0xf]
    %v56 = vld [vmem:[#allocation6 + $0xc] sm:$0xf]
    %v61 = vunpack.c.l.b16 %v53
    %v62 = vunpack.c.l.b16 %v54
    %v63 = vunpack.c.l.b16 %v55
    %v64 = vunpack.c.l.b16 %v56
    %v65 = vpack.c.b16 %v62, %v61
    %v66 = vpack.c.b16 %v64, %v63
    %vm69 = vcmask 261120
    %v71 = vsel %vm69, %v52, 0
    %73 = vmatprep.subr.bf16.mxu0 0
    %74 = vmatpush1.bf16.msra.mxu0 %v65
    %75 = vmatprep.subr.bf16.mxu0 0
    %76 = vmatpush1.bf16.msra.mxu0 %v66
    %77 = vmatprep.subr.bf16.mxu0 0
    %78 = vmatpush1.bf16.msra.mxu0 0
    %79 = vmatprep.subr.bf16.mxu0 0
    %80 = vmatpush1.bf16.msra.mxu0 0
    %81 = vmatprep.subr.bf16.mxu0 0
    %82 = vmatpush1.bf16.msra.mxu0 0
    %83 = vmatprep.subr.bf16.mxu0 0
    %84 = vmatpush1.bf16.msra.mxu0 0
    %85 = vmatprep.subr.bf16.mxu0 0
    %86 = vmatpush1.bf16.msra.mxu0 0
    %87 = vmatprep.subr.bf16.mxu0 0
    %88 = vmatpush1.bf16.msra.mxu0 0
    %89 = vmatprep.subr.bf16.mxu0 0
    %90 = vmatpush1.bf16.msra.mxu0 0
    %91 = vmatprep.subr.bf16.mxu0 0
    %92 = vmatpush1.bf16.msra.mxu0 0
    %93 = vmatprep.subr.bf16.mxu0 0
    %94 = vmatpush1.bf16.msra.mxu0 0
    %95 = vmatprep.subr.bf16.mxu0 0
    %96 = vmatpush1.bf16.msra.mxu0 0
    %97 = vmatprep.subr.bf16.mxu0 0
    %98 = vmatpush1.bf16.msra.mxu0 0
    %99 = vmatprep.subr.bf16.mxu0 0
    %100 = vmatpush1.bf16.msra.mxu0 0
    %101 = vmatprep.subr.bf16.mxu0 0
    %102 = vmatpush1.bf16.msra.mxu0 0
    %103 = vmatprep.subr.bf16.mxu0 0
    %104 = vmatpush1.bf16.msra.mxu0 0
    %105 = vmatprep.mubr.bf16.mxu0 0
    %106 = vmatmul.mubr.bf16.gmra.mrb[0].mxu0 %v71
    %v107 = vpop.f32.mrb[0].mxu0
    %v108 = vadd.f32 0.0, %v107
    %v109 = vpop.f32.mrb[0].mxu0
    %v110 = vpop.f32.mrb[0].mxu0
    %v111 = vadd.f32 0.0, %v110
    %v112 = vpop.f32.mrb[0].mxu0
    %113 = vdwg.mxu0
    %v114 = vadd.f32 %v48, %v108
    %v115 = vadd.f32 %v49, %v111
    %116 = vst.msk [vmem:[#allocation2] sm:$0xff] %vm69, %v114
    %117 = vst.msk [vmem:[#allocation2 + $0x8] sm:$0xff] %vm69, %v115
    // Predicated region
    $region22: #{tpu_custom_call.1} parent=1 // pred_check
      %p118 = pneg %p41
    $region23: #{tpu_custom_call.1} parent=1 // pred_check_branch
      %120 = sbr.rel (%p118) target = $region25
    $region24: #{tpu_custom_call.1} parent=1 // pred_region
      %v121 = vld [vmem:[#allocation2] sm:$0xff]
      %v122 = vld [vmem:[#allocation2 + $0x8] sm:$0xff]
      %v123 = vpack.c.bf16 %v122, %v121
      %v125 = vunpack.c.l.b16 %v123
      %v126 = vunpack.c.h.b16 %v123
      %v127 = vpack.c.b16 %v125, %v125
      %v128 = vpack.c.b16 %v126, %v126
      %vm131 = vcmask 257024
      %132 = vst.msk [vmem:[#allocation8] sm:$0xf] %vm131, %v127
      %133 = vst.msk [vmem:[#allocation8 + $0x4] sm:$0xf] %vm131, %v128
    $region25: #{tpu_custom_call.1} parent=1 // pred_fallthru
      _
    // Predicated region
    $region26: #{tpu_custom_call.1} parent=1 // pred_check
      _
    $region27: #{tpu_custom_call.1} parent=1 // pred_check_branch
      %135 = sbr.rel (0) target = $region29
    $region28: #{tpu_custom_call.1} parent=1 // pred_region
      %s137 = ssub.s32 128, 128
      %138 = vsyncadd [#allocation5], %s137
      %s139 = sshll.u32 [#allocation8], 4
      %s140 = int_to_ptr.vmem [resolvable:$true] %s139
      %145 = dma.vmem_to_hbm [thread:$0]  %s140, 128, %s2, [#allocation5], 64, 64, 4
    $region29: #{tpu_custom_call.1} parent=1 // pred_fallthru
      _
    // Predicated region
    $region30: #{tpu_custom_call.1} parent=1 // pred_check
      _
    $region31: #{tpu_custom_call.1} parent=1 // pred_check_branch
      %147 = sbr.rel (0) target = $region33
    $region32: #{tpu_custom_call.1} parent=1 // pred_region
      %148 = dma.done [#allocation5], 128
    $region33: #{tpu_custom_call.1} parent=1 // pred_fallthru
      _
    %149 = vsyncpa [#allocation4], 1
    %150 = vsyncpa [#allocation7], 1
    %151 = vsyncpa [#allocation5], 1

</llo_original>
